<compile_context>
chip_gen: v5e
topology: v5e:2x2
jax: 0.10.0
libtpu: 0.0.40
codegen_flags: <defaults>
</compile_context>

<pallas_src>
import math
import jax
import jax.numpy as jnp
from jax.experimental import pallas as pl
from jax.experimental.pallas import tpu as pltpu

LN_EPS = 1e-5  # torch.nn.LayerNorm default


def _round_up(n, m):
    return ((n + m - 1) // m) * m


def _make_kernel(in_dims):
    """Build the fused kernel for a fixed tuple of per-input feature widths."""
    n = len(in_dims)
    offsets = []
    off = 0
    for d in in_dims:
        offsets.append(off)
        off += d

    def kernel(*refs):
        x_refs = refs[:n]
        (wt_ref, bt_ref, g_ref, beta_ref,
         w1_ref, b1_ref, w2_ref, b2_ref, o_ref) = refs[n:]

        # ---- trunk Linear: h = concat(x) @ Wt + bt, computed per input block ----
        h = bt_ref[...]  # (1, T), broadcasts against (B, T)
        for x_ref, o, d in zip(x_refs, offsets, in_dims):
            h = h + jnp.dot(x_ref[...], wt_ref[o:o + d, :],
                            preferred_element_type=jnp.float32)

        # ---- LayerNorm (biased variance, one pass) + fused affine + Tanh ----
        mean = jnp.mean(h, axis=-1, keepdims=True)
        mean_sq = jnp.mean(h * h, axis=-1, keepdims=True)
        var = jnp.maximum(mean_sq - mean * mean, 0.0)
        inv = jax.lax.rsqrt(var + LN_EPS)          # EUP
        a = inv * g_ref[...]                       # (B,1)*(1,T) -> (B,T)
        h = h * a + (beta_ref[...] - mean * a)     # fused normalize + affine
        h = jnp.tanh(h)                            # EUP

        # ---- MLP depth=1: Linear -> ReLU -> Linear (binary=False, l2_norm=False) ----
        h = jnp.dot(h, w1_ref[...], preferred_element_type=jnp.float32) + b1_ref[...]
        h = jnp.maximum(h, 0.0)
        out = jnp.dot(h, w2_ref[...], preferred_element_type=jnp.float32) + b2_ref[...]

        o_ref[...] = out.astype(o_ref.dtype)

    return kernel


def init_params(key, input_dim, trunk_dim, hidden_dim, output_dim, dtype=jnp.float32):
    """Deterministic synthetic init (stand-in for Utils.weight_init)."""
    ks = jax.random.split(key, 3)

    def linear(k, fan_in, fan_out):
        bound = 1.0 / math.sqrt(fan_in)
        return jax.random.uniform(k, (fan_in, fan_out), dtype, -bound, bound)

    return {
        # trunk
        "wt": linear(ks[0], input_dim, trunk_dim),
        "bt": jnp.zeros((1, trunk_dim), dtype),
        "gamma": jnp.ones((1, trunk_dim), dtype),
        "beta": jnp.zeros((1, trunk_dim), dtype),
        # MLP (depth=1)
        "w1": linear(ks[1], trunk_dim, hidden_dim),
        "b1": jnp.zeros((1, hidden_dim), dtype),
        "w2": linear(ks[2], hidden_dim, output_dim),
        "b2": jnp.zeros((1, output_dim), dtype),
    }


def mlp_block(params, *xs, block_batch=256):
    batch = xs[0].shape[0]
    in_dims = tuple(int(x.shape[-1]) for x in xs)
    input_dim, trunk_dim = params["wt"].shape
    hidden_dim = params["w1"].shape[1]
    out_dim = params["w2"].shape[1]
    assert sum(in_dims) == input_dim

    # Batch padding / tiling (sublane multiple of 8; tile evenly divides padded batch).
    padded = _round_up(batch, 8)
    tb = min(padded, _round_up(block_batch, 8))
    if padded % tb:
        padded = _round_up(padded, tb)
    n_blocks = padded // tb

    if padded != batch:
        xs = tuple(jnp.pad(x, ((0, padded - batch), (0, 0))) for x in xs)

    weight_args = (params["wt"], params["bt"], params["gamma"], params["beta"],
                   params["w1"], params["b1"], params["w2"], params["b2"])
    args = (*xs, *weight_args)
    kernel = _make_kernel(in_dims)

    dtype = xs[0].dtype
    itemsize = jnp.dtype(dtype).itemsize
    flops = 2 * padded * (input_dim * trunk_dim
                          + trunk_dim * hidden_dim
                          + hidden_dim * out_dim)
    bytes_accessed = itemsize * (padded * (input_dim + out_dim)
                                 + input_dim * trunk_dim + trunk_dim * hidden_dim
                                 + hidden_dim * out_dim
                                 + 3 * trunk_dim + hidden_dim + out_dim)
    cost = pl.CostEstimate(flops=flops,
                           transcendentals=padded * trunk_dim,
                           bytes_accessed=bytes_accessed)

    out_shape = jax.ShapeDtypeStruct((padded, out_dim), dtype)

    if n_blocks == 1:
        # Small case: single fused invocation, no grid, everything VMEM-resident.
        vmem = pl.BlockSpec(memory_space=pltpu.MemorySpace.VMEM)
        out = pl.pallas_call(
            kernel,
            out_shape=out_shape,
            in_specs=[vmem] * len(args),
            out_specs=vmem,
            cost_estimate=cost,
        )(*args)
    else:
        # Batch-tiled: x/out blocks indexed by the grid, weights/biases use constant
        # index maps (stay VMEM-resident, no re-DMA per step). Batch axis marked
        # "parallel" so v7x can shard it across its 2 TensorCores.
        x_specs = [pl.BlockSpec((tb, d), lambda i: (i, 0)) for d in in_dims]
        w_specs = [pl.BlockSpec(w.shape, lambda i: (0, 0)) for w in weight_args]
        out = pl.pallas_call(
            kernel,
            out_shape=out_shape,
            grid=(n_blocks,),
            in_specs=x_specs + w_specs,
            out_specs=pl.BlockSpec((tb, out_dim), lambda i: (i, 0)),
            compiler_params=pltpu.CompilerParams(
                dimension_semantics=("parallel",)),
            cost_estimate=cost,
        )(*args)

    return out[:batch] if padded != batch else out


def mlp_block_ref(params, *xs):
    """Pure-JAX reference for correctness check."""
    h = jnp.concatenate(xs, axis=-1)
    h = h @ params["wt"] + params["bt"]
    mean = jnp.mean(h, axis=-1, keepdims=True)
    var = jnp.mean((h - mean) ** 2, axis=-1, keepdims=True)
    h = (h - mean) / jnp.sqrt(var + LN_EPS)
    h = h * params["gamma"] + params["beta"]
    h = jnp.tanh(h)
    h = jnp.maximum(h @ params["w1"] + params["b1"], 0.0)
    return h @ params["w2"] + params["b2"]


if __name__ == "__main__":
    # Config: layer_norm=True, depth=1, binary=False, l2_norm=False
    batch = 8
    input_dims = (16, 16)   # forward(*x) concatenates two 16-dim inputs -> 32
    trunk_dim = 64
    hidden_dim = 64
    output_dim = 128

    key = jax.random.PRNGKey(0)
    kp, k1, k2, k3, k4 = jax.random.split(key, 5)
    params = init_params(kp, sum(input_dims), trunk_dim, hidden_dim, output_dim)

    fwd = jax.jit(mlp_block)

    # Small batch -> gridless single fused invocation.
    x1 = jax.random.normal(k1, (batch, input_dims[0]), jnp.float32)
    x2 = jax.random.normal(k2, (batch, input_dims[1]), jnp.float32)
    out = jax.block_until_ready(fwd(params, x1, x2))
    ref = mlp_block_ref(params, x1, x2)
    assert out.shape == (batch, output_dim)
    assert jnp.allclose(out, ref, atol=1e-4, rtol=1e-4)

    # Larger, non-multiple batch -> exercises the batch-tiled "parallel" grid path.
    big = 300
    y1 = jax.random.normal(k3, (big, input_dims[0]), jnp.float32)
    y2 = jax.random.normal(k4, (big, input_dims[1]), jnp.float32)
    fwd_tiled = jax.jit(lambda p, a, b: mlp_block(p, a, b, block_batch=128))
    out_big = jax.block_until_ready(fwd_tiled(params, y1, y2))
    ref_big = mlp_block_ref(params, y1, y2)
    assert out_big.shape == (big, output_dim)
    assert jnp.allclose(out_big, ref_big, atol=1e-4, rtol=1e-4)

    print("KERNEL_OK")
</pallas_src>

<mosaic_0001>
module attributes {stable_mosaic.version = 11 : i64} {
  func.func @kernel(%arg0: memref<8x16xf32, #tpu.memory_space<vmem>>, %arg1: memref<8x16xf32, #tpu.memory_space<vmem>>, %arg2: memref<32x64xf32, #tpu.memory_space<vmem>>, %arg3: memref<1x64xf32, #tpu.memory_space<vmem>>, %arg4: memref<1x64xf32, #tpu.memory_space<vmem>>, %arg5: memref<1x64xf32, #tpu.memory_space<vmem>>, %arg6: memref<64x64xf32, #tpu.memory_space<vmem>>, %arg7: memref<1x64xf32, #tpu.memory_space<vmem>>, %arg8: memref<64x128xf32, #tpu.memory_space<vmem>>, %arg9: memref<1x128xf32, #tpu.memory_space<vmem>>, %arg10: memref<8x128xf32, #tpu.memory_space<vmem>>) attributes {dimension_semantics = [], scalar_prefetch = 0 : i64, scratch_operands = 0 : i64, tpu.core_type = #tpu.core_type<tc>} {
    %c0 = arith.constant 0 : index
    %c0_0 = arith.constant 0 : index
    %0 = vector.load %arg3[%c0, %c0_0] : memref<1x64xf32, #tpu.memory_space<vmem>>, vector<1x64xf32>
    %c0_1 = arith.constant 0 : index
    %c0_2 = arith.constant 0 : index
    %1 = vector.load %arg0[%c0_1, %c0_2] : memref<8x16xf32, #tpu.memory_space<vmem>>, vector<8x16xf32>
    %c0_3 = arith.constant 0 : index
    %c0_4 = arith.constant 0 : index
    %2 = vector.load %arg2[%c0_3, %c0_4] : memref<32x64xf32, #tpu.memory_space<vmem>>, vector<16x64xf32>
    %cst = arith.constant dense<0.000000e+00> : vector<8x64xf32>
    %3 = tpu.matmul %1, %2, %cst {dimension_numbers = #tpu.dot_dimension_numbers<[1], [0], [0], [1], [0, 0, 1, 1], [], []>} : vector<8x16xf32>, vector<16x64xf32>, vector<8x64xf32> -> vector<8x64xf32>
    %4 = vector.broadcast %0 : vector<1x64xf32> to vector<8x64xf32>
    %5 = arith.addf %4, %3 : vector<8x64xf32>
    %c0_5 = arith.constant 0 : index
    %c0_6 = arith.constant 0 : index
    %6 = vector.load %arg1[%c0_5, %c0_6] : memref<8x16xf32, #tpu.memory_space<vmem>>, vector<8x16xf32>
    %c16 = arith.constant 16 : index
    %c0_7 = arith.constant 0 : index
    %7 = vector.load %arg2[%c16, %c0_7] : memref<32x64xf32, #tpu.memory_space<vmem>>, vector<16x64xf32>
    %cst_8 = arith.constant dense<0.000000e+00> : vector<8x64xf32>
    %8 = tpu.matmul %6, %7, %cst_8 {dimension_numbers = #tpu.dot_dimension_numbers<[1], [0], [0], [1], [0, 0, 1, 1], [], []>} : vector<8x16xf32>, vector<16x64xf32>, vector<8x64xf32> -> vector<8x64xf32>
    %9 = arith.addf %5, %8 : vector<8x64xf32>
    %cst_9 = arith.constant dense<0.000000e+00> : vector<8xf32>
    %10 = vector.multi_reduction <add>, %9, %cst_9 [1] : vector<8x64xf32> to vector<8xf32>
    %11 = vector.shape_cast %10 : vector<8xf32> to vector<8x1xf32>
    %cst_10 = arith.constant 6.400000e+01 : f32
    %12 = vector.broadcast %cst_10 : f32 to vector<8x1xf32>
    %13 = arith.divf %11, %12 : vector<8x1xf32>
    %14 = arith.mulf %9, %9 : vector<8x64xf32>
    %cst_11 = arith.constant dense<0.000000e+00> : vector<8xf32>
    %15 = vector.multi_reduction <add>, %14, %cst_11 [1] : vector<8x64xf32> to vector<8xf32>
    %16 = vector.shape_cast %15 : vector<8xf32> to vector<8x1xf32>
    %cst_12 = arith.constant 6.400000e+01 : f32
    %17 = vector.broadcast %cst_12 : f32 to vector<8x1xf32>
    %18 = arith.divf %16, %17 : vector<8x1xf32>
    %19 = arith.mulf %13, %13 : vector<8x1xf32>
    %20 = arith.subf %18, %19 : vector<8x1xf32>
    %cst_13 = arith.constant 0.000000e+00 : f32
    %21 = vector.broadcast %cst_13 : f32 to vector<8x1xf32>
    %22 = arith.maximumf %20, %21 : vector<8x1xf32>
    %cst_14 = arith.constant 9.99999974E-6 : f32
    %23 = vector.broadcast %cst_14 : f32 to vector<8x1xf32>
    %24 = arith.addf %22, %23 : vector<8x1xf32>
    %25 = math.rsqrt %24 : vector<8x1xf32>
    %c0_15 = arith.constant 0 : index
    %c0_16 = arith.constant 0 : index
    %26 = vector.load %arg4[%c0_15, %c0_16] : memref<1x64xf32, #tpu.memory_space<vmem>>, vector<1x64xf32>
    %27 = vector.broadcast %25 : vector<8x1xf32> to vector<8x64xf32>
    %28 = vector.broadcast %26 : vector<1x64xf32> to vector<8x64xf32>
    %29 = arith.mulf %27, %28 : vector<8x64xf32>
    %30 = arith.mulf %9, %29 : vector<8x64xf32>
    %c0_17 = arith.constant 0 : index
    %c0_18 = arith.constant 0 : index
    %31 = vector.load %arg5[%c0_17, %c0_18] : memref<1x64xf32, #tpu.memory_space<vmem>>, vector<1x64xf32>
    %32 = vector.broadcast %13 : vector<8x1xf32> to vector<8x64xf32>
    %33 = arith.mulf %32, %29 : vector<8x64xf32>
    %34 = vector.broadcast %31 : vector<1x64xf32> to vector<8x64xf32>
    %35 = arith.subf %34, %33 : vector<8x64xf32>
    %36 = arith.addf %30, %35 : vector<8x64xf32>
    %37 = math.tanh %36 : vector<8x64xf32>
    %c0_19 = arith.constant 0 : index
    %c0_20 = arith.constant 0 : index
    %38 = vector.load %arg6[%c0_19, %c0_20] : memref<64x64xf32, #tpu.memory_space<vmem>>, vector<64x64xf32>
    %cst_21 = arith.constant dense<0.000000e+00> : vector<8x64xf32>
    %39 = tpu.matmul %37, %38, %cst_21 {dimension_numbers = #tpu.dot_dimension_numbers<[1], [0], [0], [1], [0, 0, 1, 1], [], []>} : vector<8x64xf32>, vector<64x64xf32>, vector<8x64xf32> -> vector<8x64xf32>
    %c0_22 = arith.constant 0 : index
    %c0_23 = arith.constant 0 : index
    %40 = vector.load %arg7[%c0_22, %c0_23] : memref<1x64xf32, #tpu.memory_space<vmem>>, vector<1x64xf32>
    %41 = vector.broadcast %40 : vector<1x64xf32> to vector<8x64xf32>
    %42 = arith.addf %39, %41 : vector<8x64xf32>
    %cst_24 = arith.constant 0.000000e+00 : f32
    %43 = vector.broadcast %cst_24 : f32 to vector<8x64xf32>
    %44 = arith.maximumf %42, %43 : vector<8x64xf32>
    %c0_25 = arith.constant 0 : index
    %c0_26 = arith.constant 0 : index
    %45 = vector.load %arg8[%c0_25, %c0_26] : memref<64x128xf32, #tpu.memory_space<vmem>>, vector<64x128xf32>
    %cst_27 = arith.constant dense<0.000000e+00> : vector<8x128xf32>
    %46 = tpu.matmul %44, %45, %cst_27 {dimension_numbers = #tpu.dot_dimension_numbers<[1], [0], [0], [1], [0, 0, 1, 1], [], []>} : vector<8x64xf32>, vector<64x128xf32>, vector<8x128xf32> -> vector<8x128xf32>
    %c0_28 = arith.constant 0 : index
    %c0_29 = arith.constant 0 : index
    %47 = vector.load %arg9[%c0_28, %c0_29] : memref<1x128xf32, #tpu.memory_space<vmem>>, vector<1x128xf32>
    %48 = vector.broadcast %47 : vector<1x128xf32> to vector<8x128xf32>
    %49 = arith.addf %46, %48 : vector<8x128xf32>
    %c0_30 = arith.constant 0 : index
    %c0_31 = arith.constant 0 : index
    %50 = vector.load %arg10[%c0_30, %c0_31] : memref<8x128xf32, #tpu.memory_space<vmem>>, vector<8x128xf32>
    tpu.vector_store %arg10[%c0_30, %c0_31], %49 {strides = array<i32>} : memref<8x128xf32, #tpu.memory_space<vmem>>, vector<8x128xf32>,
    return
  }
}

</mosaic_0001>

<llo_original>
// kernel: mlp_block.1
$region0: #{mlp_block.1}
  #allocation0 [shape = 'u32[]', space=smem, size = 0x4, offset = 0x4, fixed_abs, tag = 'smem constant byte address 0x4 - core index']
  #allocation1 [shape = 'u32[72,128]{1,0:T(1,128)}', space=vmem, size = 0x9000, scoped, tag = 'internal scratch']
  %s0 = inlined_call_operand.hbm [shape: f32[8,16], index: 0, kind: input, shape index: {}]
  %s1 = inlined_call_operand.vmem [shape: f32[8,16], index: 1, kind: input, shape index: {}]
  %s2 = inlined_call_operand.hbm [shape: f32[32,64], index: 2, kind: input, shape index: {}]
  %s3 = inlined_call_operand.hbm [shape: f32[1,64], index: 3, kind: input, shape index: {}]
  %s4 = inlined_call_operand.hbm [shape: f32[1,64], index: 4, kind: input, shape index: {}]
  %s5 = inlined_call_operand.hbm [shape: f32[1,64], index: 5, kind: input, shape index: {}]
  %s6 = inlined_call_operand.hbm [shape: f32[64,64], index: 6, kind: input, shape index: {}]
  %s7 = inlined_call_operand.hbm [shape: f32[1,64], index: 7, kind: input, shape index: {}]
  %s8 = inlined_call_operand.hbm [shape: f32[64,128], index: 8, kind: input, shape index: {}]
  %s9 = inlined_call_operand.hbm [shape: f32[1,128], index: 9, kind: input, shape index: {}]
  %s10 = inlined_call_operand.hbm [shape: f32[8,128], index: 10, kind: output, shape index: {}]
  %s11 = sld [smem:[#allocation0]]
  $region86: #{mlp_block.1} parent=0
    _
  %s13 = ssub.s32 1, %s11
  %s14 = scalar_select 0, %s13, %s11
  $region1: #{mlp_block.1} parent=0
    #allocation2 [shape = 'u8[4096]{0}', space=vmem, size = 0x1000, scoped, tag = 'input window, operand 0, single buffered']
    #allocation3 [shape = 's32[1]{0}', space=sflag, size = 0x4, scoped, tag = 'scoped memory for mlp_block.1']
    #allocation4 [shape = 's32[1]{0}', space=sflag, size = 0x4, scoped, tag = 'scoped memory for mlp_block.1']
    #allocation5 [shape = 'u8[16384]{0}', space=vmem, size = 0x4000, scoped, tag = 'input window, operand 2, single buffered']
    #allocation6 [shape = 's32[1]{0}', space=sflag, size = 0x4, scoped, tag = 'scoped memory for mlp_block.1']
    #allocation7 [shape = 'u8[512]{0}', space=vmem, size = 0x400, scoped, tag = 'input window, operand 3, single buffered']
    #allocation8 [shape = 'u8[512]{0}', space=vmem, size = 0x400, scoped, tag = 'input window, operand 4, single buffered']
    #allocation9 [shape = 's32[1]{0}', space=sflag, size = 0x4, scoped, tag = 'scoped memory for mlp_block.1']
    #allocation10 [shape = 'u8[512]{0}', space=vmem, size = 0x400, scoped, tag = 'input window, operand 5, single buffered']
    #allocation11 [shape = 'u8[32768]{0}', space=vmem, size = 0x8000, scoped, tag = 'input window, operand 6, single buffered']
    #allocation12 [shape = 's32[1]{0}', space=sflag, size = 0x4, scoped, tag = 'scoped memory for mlp_block.1']
    #allocation13 [shape = 'u8[512]{0}', space=vmem, size = 0x400, scoped, tag = 'input window, operand 7, single buffered']
    #allocation14 [shape = 'u8[32768]{0}', space=vmem, size = 0x8000, scoped, tag = 'input window, operand 8, single buffered']
    #allocation15 [shape = 's32[1]{0}', space=sflag, size = 0x4, scoped, tag = 'scoped memory for mlp_block.1']
    #allocation16 [shape = 'u8[512]{0}', space=vmem, size = 0x400, scoped, tag = 'input window, operand 9, single buffered']
    #allocation17 [shape = 'u8[4096]{0}', space=vmem, size = 0x1000, scoped, tag = 'output window, operand 0, single buffered']
    %15 = vsyncpa [#allocation3], 0
    %16 = vsyncpa [#allocation6], 0
    %17 = vsyncpa [#allocation9], 0
    %18 = vsyncpa [#allocation12], 0
    %19 = vsyncpa [#allocation15], 0
    %20 = vsyncpa [#allocation4], 0
    // Predicated region
    $region2: #{mlp_block.1} parent=1 // pred_check
      _
    $region3: #{mlp_block.1} parent=1 // pred_check_branch
      %22 = sbr.rel (0) target = $region5
    $region4: #{mlp_block.1} parent=1 // pred_region
      %24 = vsyncadd [#allocation3], 0
      %s26 = sshll.u32 %s0, 4
      %s27 = int_to_ptr.hbm [resolvable:$true] %s26
      %s28 = sshll.u32 [#allocation2], 4
      %s29 = int_to_ptr.vmem [resolvable:$true] %s28
      %31 = dma.hbm_to_vmem [thread:$0]  %s27, 128, %s29, [#allocation3]
    $region5: #{mlp_block.1} parent=1 // pred_fallthru
      _
    // Predicated region
    $region6: #{mlp_block.1} parent=1 // pred_check
      _
    $region7: #{mlp_block.1} parent=1 // pred_check_branch
      %33 = sbr.rel (0) target = $region9
    $region8: #{mlp_block.1} parent=1 // pred_region
      _
    $region9: #{mlp_block.1} parent=1 // pred_fallthru
      _
    // Predicated region
    $region10: #{mlp_block.1} parent=1 // pred_check
      _
    $region11: #{mlp_block.1} parent=1 // pred_check_branch
      %35 = sbr.rel (0) target = $region13
    $region12: #{mlp_block.1} parent=1 // pred_region
      %37 = vsyncadd [#allocation6], 0
      %s38 = sshll.u32 %s2, 4
      %s39 = int_to_ptr.hbm [resolvable:$true] %s38
      %s40 = sshll.u32 [#allocation5], 4
      %s41 = int_to_ptr.vmem [resolvable:$true] %s40
      %46 = dma.hbm_to_vmem [thread:$0]  %s39, 512, %s41, [#allocation6], 128, 128, 8
    $region13: #{mlp_block.1} parent=1 // pred_fallthru
      _
    // Predicated region
    $region14: #{mlp_block.1} parent=1 // pred_check
      _
    $region15: #{mlp_block.1} parent=1 // pred_check_branch
      %48 = sbr.rel (0) target = $region17
    $region16: #{mlp_block.1} parent=1 // pred_region
      %50 = vsyncadd [#allocation6], 0
      %s52 = sshll.u32 %s3, 4
      %s53 = int_to_ptr.hbm [resolvable:$true] %s52
      %s54 = sshll.u32 [#allocation7], 4
      %s55 = int_to_ptr.vmem [resolvable:$true] %s54
      %57 = dma.hbm_to_vmem [thread:$0]  %s53, 16, %s55, [#allocation6]
    $region17: #{mlp_block.1} parent=1 // pred_fallthru
      _
    // Predicated region
    $region18: #{mlp_block.1} parent=1 // pred_check
      _
    $region19: #{mlp_block.1} parent=1 // pred_check_branch
      %59 = sbr.rel (0) target = $region21
    $region20: #{mlp_block.1} parent=1 // pred_region
      %61 = vsyncadd [#allocation9], 0
      %s63 = sshll.u32 %s4, 4
      %s64 = int_to_ptr.hbm [resolvable:$true] %s63
      %s65 = sshll.u32 [#allocation8], 4
      %s66 = int_to_ptr.vmem [resolvable:$true] %s65
      %68 = dma.hbm_to_vmem [thread:$0]  %s64, 16, %s66, [#allocation9]
    $region21: #{mlp_block.1} parent=1 // pred_fallthru
      _
    // Predicated region
    $region22: #{mlp_block.1} parent=1 // pred_check
      _
    $region23: #{mlp_block.1} parent=1 // pred_check_branch
      %70 = sbr.rel (0) target = $region25
    $region24: #{mlp_block.1} parent=1 // pred_region
      %72 = vsyncadd [#allocation9], 0
      %s74 = sshll.u32 %s5, 4
      %s75 = int_to_ptr.hbm [resolvable:$true] %s74
      %s76 = sshll.u32 [#allocation10], 4
      %s77 = int_to_ptr.vmem [resolvable:$true] %s76
      %79 = dma.hbm_to_vmem [thread:$0]  %s75, 16, %s77, [#allocation9]
    $region25: #{mlp_block.1} parent=1 // pred_fallthru
      _
    // Predicated region
    $region26: #{mlp_block.1} parent=1 // pred_check
      _
    $region27: #{mlp_block.1} parent=1 // pred_check_branch
      %81 = sbr.rel (0) target = $region29
    $region28: #{mlp_block.1} parent=1 // pred_region
      %83 = vsyncadd [#allocation12], 0
      %s84 = sshll.u32 %s6, 4
      %s85 = int_to_ptr.hbm [resolvable:$true] %s84
      %s86 = sshll.u32 [#allocation11], 4
      %s87 = int_to_ptr.vmem [resolvable:$true] %s86
      %92 = dma.hbm_to_vmem [thread:$0]  %s85, 1024, %s87, [#allocation12], 128, 128, 8
    $region29: #{mlp_block.1} parent=1 // pred_fallthru
      _
    // Predicated region
    $region30: #{mlp_block.1} parent=1 // pred_check
      _
    $region31: #{mlp_block.1} parent=1 // pred_check_branch
      %94 = sbr.rel (0) target = $region33
    $region32: #{mlp_block.1} parent=1 // pred_region
      %96 = vsyncadd [#allocation12], 0
      %s98 = sshll.u32 %s7, 4
      %s99 = int_to_ptr.hbm [resolvable:$true] %s98
      %s100 = sshll.u32 [#allocation13], 4
      %s101 = int_to_ptr.vmem [resolvable:$true] %s100
      %103 = dma.hbm_to_vmem [thread:$0]  %s99, 16, %s101, [#allocation12]
    $region33: #{mlp_block.1} parent=1 // pred_fallthru
      _
    // Predicated region
    $region34: #{mlp_block.1} parent=1 // pred_check
      _
    $region35: #{mlp_block.1} parent=1 // pred_check_branch
      %105 = sbr.rel (0) target = $region37
    $region36: #{mlp_block.1} parent=1 // pred_region
      %107 = vsyncadd [#allocation15], 0
      %s108 = sshll.u32 %s8, 4
      %s109 = int_to_ptr.hbm [resolvable:$true] %s108
      %s110 = sshll.u32 [#allocation14], 4
      %s111 = int_to_ptr.vmem [resolvable:$true] %s110
      %116 = dma.hbm_to_vmem [thread:$0]  %s109, 1024, %s111, [#allocation15], 128, 128, 8
    $region37: #{mlp_block.1} parent=1 // pred_fallthru
      _
    // Predicated region
    $region38: #{mlp_block.1} parent=1 // pred_check
      _
    $region39: #{mlp_block.1} parent=1 // pred_check_branch
      %118 = sbr.rel (0) target = $region41
    $region40: #{mlp_block.1} parent=1 // pred_region
      %120 = vsyncadd [#allocation15], 0
      %s122 = sshll.u32 %s9, 4
      %s123 = int_to_ptr.hbm [resolvable:$true] %s122
      %s124 = sshll.u32 [#allocation16], 4
      %s125 = int_to_ptr.vmem [resolvable:$true] %s124
      %127 = dma.hbm_to_vmem [thread:$0]  %s123, 16, %s125, [#allocation15]
    $region41: #{mlp_block.1} parent=1 // pred_fallthru
      _
    // Predicated region
    $region42: #{mlp_block.1} parent=1 // pred_check
      _
    $region43: #{mlp_block.1} parent=1 // pred_check_branch
      %129 = sbr.rel (0) target = $region45
    $region44: #{mlp_block.1} parent=1 // pred_region
      %131 = dma.done [#allocation3], 128
    $region45: #{mlp_block.1} parent=1 // pred_fallthru
      _
    // Predicated region
    $region46: #{mlp_block.1} parent=1 // pred_check
      _
    $region47: #{mlp_block.1} parent=1 // pred_check_branch
      %133 = sbr.rel (0) target = $region49
    $region48: #{mlp_block.1} parent=1 // pred_region
      %135 = dma.done [#allocation6], 512
    $region49: #{mlp_block.1} parent=1 // pred_fallthru
      _
    // Predicated region
    $region50: #{mlp_block.1} parent=1 // pred_check
      _
    $region51: #{mlp_block.1} parent=1 // pred_check_branch
      %137 = sbr.rel (0) target = $region53
    $region52: #{mlp_block.1} parent=1 // pred_region
      %139 = dma.done [#allocation6], 16
    $region53: #{mlp_block.1} parent=1 // pred_fallthru
      _
    // Predicated region
    $region54: #{mlp_block.1} parent=1 // pred_check
      _
    $region55: #{mlp_block.1} parent=1 // pred_check_branch
      %141 = sbr.rel (0) target = $region57
    $region56: #{mlp_block.1} parent=1 // pred_region
      %143 = dma.done [#allocation9], 16
    $region57: #{mlp_block.1} parent=1 // pred_fallthru
      _
    // Predicated region
    $region58: #{mlp_block.1} parent=1 // pred_check
      _
    $region59: #{mlp_block.1} parent=1 // pred_check_branch
      %145 = sbr.rel (0) target = $region61
    $region60: #{mlp_block.1} parent=1 // pred_region
      %147 = dma.done [#allocation9], 16
    $region61: #{mlp_block.1} parent=1 // pred_fallthru
      _
    // Predicated region
    $region62: #{mlp_block.1} parent=1 // pred_check
      _
    $region63: #{mlp_block.1} parent=1 // pred_check_branch
      %149 = sbr.rel (0) target = $region65
    $region64: #{mlp_block.1} parent=1 // pred_region
      %151 = dma.done [#allocation12], 1024
    $region65: #{mlp_block.1} parent=1 // pred_fallthru
      _
    // Predicated region
    $region66: #{mlp_block.1} parent=1 // pred_check
      _
    $region67: #{mlp_block.1} parent=1 // pred_check_branch
      %153 = sbr.rel (0) target = $region69
    $region68: #{mlp_block.1} parent=1 // pred_region
      %155 = dma.done [#allocation12], 16
    $region69: #{mlp_block.1} parent=1 // pred_fallthru
      _
    // Predicated region
    $region70: #{mlp_block.1} parent=1 // pred_check
      _
    $region71: #{mlp_block.1} parent=1 // pred_check_branch
      %157 = sbr.rel (0) target = $region73
    $region72: #{mlp_block.1} parent=1 // pred_region
      %159 = dma.done [#allocation15], 1024
    $region73: #{mlp_block.1} parent=1 // pred_fallthru
      _
    // Predicated region
    $region74: #{mlp_block.1} parent=1 // pred_check
      _
    $region75: #{mlp_block.1} parent=1 // pred_check_branch
      %161 = sbr.rel (0) target = $region77
    $region76: #{mlp_block.1} parent=1 // pred_region
      %163 = dma.done [#allocation15], 16
    $region77: #{mlp_block.1} parent=1 // pred_fallthru
      _
    %v164 = vld [vmem:[#allocation7] sm:$0x1]
    %v165 = vld [vmem:[#allocation2] sm:$0xff]
    %v166 = vld [vmem:[#allocation5] sm:$0xff]
    %v167 = vld [vmem:[#allocation5 + $0x8] sm:$0xff]
    %vm168 = vcmask 130048
    %v170 = vsel %vm168, %v165, 0
    %172 = vmatpush.msra.mxu0 0.0
    %173 = vmatpush.msra.mxu0 0.0
    %174 = vmatpush.msra.mxu0 0.0
    %175 = vmatpush.msra.mxu0 0.0
    %176 = vmatpush.msra.mxu0 0.0
    %177 = vmatpush.msra.mxu0 0.0
    %178 = vmatpush.msra.mxu0 0.0
    %179 = vmatpush.msra.mxu0 0.0
    %180 = vmatpush.msra.mxu0 0.0
    %181 = vmatpush.msra.mxu0 0.0
    %182 = vmatpush.msra.mxu0 0.0
    %183 = vmatpush.msra.mxu0 0.0
    %184 = vmatpush.msra.mxu0 0.0
    %185 = vmatpush.msra.mxu0 0.0
    %186 = vmatpush.msra.mxu0 %v167
    %187 = vmatpush.msra.mxu0 %v166
    %188 = vmatmul.f32.gmra.mxu0 %v170
    %v189 = vpop.f32.mrf.mxu0
    %v190 = vadd.f32 0.0, %v189
    %191 = vdwg.mxu0
    %v193 = vperm.slane %v164, 0
    %v195 = vadd.f32 %v193, %v190
    %v196 = vld [vmem:[%s1] sm:$0xff]
    %v197 = vld [vmem:[#allocation5 + $0x10] sm:$0xff]
    %v198 = vld [vmem:[#allocation5 + $0x18] sm:$0xff]
    %v200 = vsel %vm168, %v196, 0
    %202 = vmatpush.msra.mxu0 0.0
    %203 = vmatpush.msra.mxu0 0.0
    %204 = vmatpush.msra.mxu0 0.0
    %205 = vmatpush.msra.mxu0 0.0
    %206 = vmatpush.msra.mxu0 0.0
    %207 = vmatpush.msra.mxu0 0.0
    %208 = vmatpush.msra.mxu0 0.0
    %209 = vmatpush.msra.mxu0 0.0
    %210 = vmatpush.msra.mxu0 0.0
    %211 = vmatpush.msra.mxu0 0.0
    %212 = vmatpush.msra.mxu0 0.0
    %213 = vmatpush.msra.mxu0 0.0
    %214 = vmatpush.msra.mxu0 0.0
    %215 = vmatpush.msra.mxu0 0.0
    %216 = vmatpush.msra.mxu0 %v198
    %217 = vmatpush.msra.mxu0 %v197
    %218 = vmatmul.f32.gmra.mxu0 %v200
    %v219 = vpop.f32.mrf.mxu0
    %v220 = vadd.f32 0.0, %v219
    %221 = vdwg.mxu0
    %v222 = vadd.f32 %v195, %v220
    %vm223 = vcmask 523264
    %v224 = vsel %vm223, %v222, 0.0
    %225 = vadd.xlane.f32.xlu0 %v224
    %v226 = vpop.xlane.xlu0 %225
    %v227 = vrcp.pop 64.0
    %v228 = vmul.f32 64.0, %v227
    %v229 = vsub.f32 1.0, %v228
    %v230 = vmul.f32 %v227, %v229
    %v231 = vadd.f32 %v227, %v230
    %vm232 = vweird.f32 %v227
    %v233 = vsel %vm232, %v227, %v231
    %v234 = vmul.f32 %v226, %v233
    %v235 = vmul.f32 %v222, %v222
    %v236 = vsel %vm223, %v235, 0.0
    %237 = vadd.xlane.f32.xlu0 %v236
    %v238 = vpop.xlane.xlu0 %237
    %v239 = vmul.f32 %v238, %v233
    %v240 = vmul.f32 %v234, %v234
    %v241 = vsub.f32 %v239, %v240
    %v242 = vmax.f32 %v241, 0.0
    %v243 = vadd.f32 %v242, 1e-05
    %v244 = vrsqrt.pop %v243
    %v245 = vmul.f32 %v244, %v243
    %v246 = vmul.f32 %v245, %v244
    %v247 = vmul.f32 0.5, %v246
    %v248 = vsub.f32 1.5, %v247
    %v249 = vmul.f32 %v244, %v248
    %vm250 = vweird.f32 %v243
    %vm251 = vweird.f32 %v244
    %vm252 = vmor %vm250, %vm251
    %v253 = vsel %vm252, %v244, %v249
    %v254 = vld [vmem:[#allocation8] sm:$0x1]
    %v256 = vperm.slane %v254, 0
    %v258 = vmul.f32 %v253, %v256
    %v259 = vmul.f32 %v222, %v258
    %v260 = vld [vmem:[#allocation10] sm:$0x1]
    %v261 = vmul.f32 %v234, %v258
    %v263 = vperm.slane %v260, 0
    %v265 = vsub.f32 %v263, %v261
    %v266 = vadd.f32 %v259, %v265
    %v267 = vtanh.pop %v266
    %v268 = vld [vmem:[#allocation11] sm:$0xff]
    %v269 = vld [vmem:[#allocation11 + $0x8] sm:$0xff]
    %v270 = vld [vmem:[#allocation11 + $0x10] sm:$0xff]
    %v271 = vld [vmem:[#allocation11 + $0x18] sm:$0xff]
    %v272 = vld [vmem:[#allocation11 + $0x20] sm:$0xff]
    %v273 = vld [vmem:[#allocation11 + $0x28] sm:$0xff]
    %v274 = vld [vmem:[#allocation11 + $0x30] sm:$0xff]
    %v275 = vld [vmem:[#allocation11 + $0x38] sm:$0xff]
    %v276 = vld [vmem:[#allocation13] sm:$0x1]
    %v278 = vperm.slane %v276, 0
    %v281 = vsel %vm223, %v267, 0
    %283 = vmatpush.msra.mxu0 0.0
    %284 = vmatpush.msra.mxu0 0.0
    %285 = vmatpush.msra.mxu0 0.0
    %286 = vmatpush.msra.mxu0 0.0
    %287 = vmatpush.msra.mxu0 0.0
    %288 = vmatpush.msra.mxu0 0.0
    %289 = vmatpush.msra.mxu0 0.0
    %290 = vmatpush.msra.mxu0 0.0
    %291 = vmatpush.msra.mxu0 %v275
    %292 = vmatpush.msra.mxu0 %v274
    %293 = vmatpush.msra.mxu0 %v273
    %294 = vmatpush.msra.mxu0 %v272
    %295 = vmatpush.msra.mxu0 %v271
    %296 = vmatpush.msra.mxu0 %v270
    %297 = vmatpush.msra.mxu0 %v269
    %298 = vmatpush.msra.mxu0 %v268
    %299 = vmatmul.f32.gmra.mxu0 %v281
    %v300 = vpop.f32.mrf.mxu0
    %v301 = vadd.f32 %v278, %v300
    %302 = vdwg.mxu0
    %v303 = vmax.f32 %v301, 0.0
    %v304 = vld [vmem:[#allocation14] sm:$0xff]
    %v305 = vld [vmem:[#allocation14 + $0x8] sm:$0xff]
    %v306 = vld [vmem:[#allocation14 + $0x10] sm:$0xff]
    %v307 = vld [vmem:[#allocation14 + $0x18] sm:$0xff]
    %v308 = vld [vmem:[#allocation14 + $0x20] sm:$0xff]
    %v309 = vld [vmem:[#allocation14 + $0x28] sm:$0xff]
    %v310 = vld [vmem:[#allocation14 + $0x30] sm:$0xff]
    %v311 = vld [vmem:[#allocation14 + $0x38] sm:$0xff]
    %v312 = vld [vmem:[#allocation16] sm:$0x1]
    %v314 = vperm.slane %v312, 0
    %v317 = vsel %vm223, %v303, 0
    %319 = vmatpush.msra.mxu0 0.0
    %320 = vmatpush.msra.mxu0 0.0
    %321 = vmatpush.msra.mxu0 0.0
    %322 = vmatpush.msra.mxu0 0.0
    %323 = vmatpush.msra.mxu0 0.0
    %324 = vmatpush.msra.mxu0 0.0
    %325 = vmatpush.msra.mxu0 0.0
    %326 = vmatpush.msra.mxu0 0.0
    %327 = vmatpush.msra.mxu0 %v311
    %328 = vmatpush.msra.mxu0 %v310
    %329 = vmatpush.msra.mxu0 %v309
    %330 = vmatpush.msra.mxu0 %v308
    %331 = vmatpush.msra.mxu0 %v307
    %332 = vmatpush.msra.mxu0 %v306
    %333 = vmatpush.msra.mxu0 %v305
    %334 = vmatpush.msra.mxu0 %v304
    %335 = vmatmul.f32.gmra.mxu0 %v317
    %v336 = vpop.f32.mrf.mxu0
    %v337 = vadd.f32 %v314, %v336
    %338 = vdwg.mxu0
    %339 = vst [vmem:[#allocation17] sm:$0xff] %v337
    // Predicated region
    $region78: #{mlp_block.1} parent=1 // pred_check
      _
    $region79: #{mlp_block.1} parent=1 // pred_check_branch
      %341 = sbr.rel (0) target = $region81
    $region80: #{mlp_block.1} parent=1 // pred_region
      %343 = vsyncadd [#allocation4], 0
      %s345 = sshll.u32 [#allocation17], 4
      %s346 = int_to_ptr.vmem [resolvable:$true] %s345
      %s347 = sshll.u32 %s10, 4
      %s348 = int_to_ptr.hbm [resolvable:$true] %s347
      %350 = dma.vmem_to_hbm [thread:$0]  %s346, 128, %s348, [#allocation4]
    $region81: #{mlp_block.1} parent=1 // pred_fallthru
      _
    // Predicated region
    $region82: #{mlp_block.1} parent=1 // pred_check
      _
    $region83: #{mlp_block.1} parent=1 // pred_check_branch
      %352 = sbr.rel (0) target = $region85
    $region84: #{mlp_block.1} parent=1 // pred_region
      %354 = dma.done [#allocation4], 128
    $region85: #{mlp_block.1} parent=1 // pred_fallthru
      _
    %355 = vsyncpa [#allocation3], 1
    %356 = vsyncpa [#allocation6], 1
    %357 = vsyncpa [#allocation9], 1
    %358 = vsyncpa [#allocation12], 1
    %359 = vsyncpa [#allocation15], 1
    %360 = vsyncpa [#allocation4], 1

</llo_original>
